<compile_context>
chip_gen: v7x
topology: tpu7x:2x2x1
jax: 0.10.0
libtpu: 0.0.40
codegen_flags: <defaults>
</compile_context>

<pallas_src>
import jax
import jax.numpy as jnp
from jax.experimental import pallas as pl
from jax.experimental.pallas import tpu as pltpu


_LANE = 128
_SUBLANE = 8
# Conservative live-VMEM budget for double-buffered tiles + f32 accumulator.
_VMEM_TILE_BUDGET = 40 * 1024 * 1024


def _round_up(x: int, m: int) -> int:
    return ((x + m - 1) // m) * m


def _lane_tile(padded_dim: int, preferred: int) -> int:
    """Largest multiple of 128 that is <= preferred and divides padded_dim
    (padded_dim is always a multiple of 128)."""
    t = max(_LANE, (min(preferred, padded_dim) // _LANE) * _LANE)
    while padded_dim % t:
        t -= _LANE
    return t


def _linear_kernel(x_ref, w_ref, b_ref, o_ref, acc_ref):
    # x_ref  : (tm, tk) VMEM activation tile
    # w_ref  : (tk, tn) VMEM weight tile, K-major (pre-transposed once)
    # b_ref  : (1,  tn) VMEM bias tile (f32)
    # o_ref  : (tm, tn) VMEM output tile
    # acc_ref: (tm, tn) VMEM f32 accumulator, persists across the K grid axis
    k = pl.program_id(2)

    @pl.when(k == 0)
    def _():
        acc_ref[...] = jnp.zeros_like(acc_ref)

    acc_ref[...] += jnp.dot(x_ref[...], w_ref[...],
                            preferred_element_type=jnp.float32)

    @pl.when(k == pl.num_programs(2) - 1)
    def _():
        # Bias added exactly once, in the finalize; single cast to out dtype.
        o_ref[...] = (acc_ref[...] + b_ref[...]).astype(o_ref.dtype)


def prepare_linear_params(weight, bias, *, param_dtype=None):
    """One-time parameter preparation (do this at init, NOT per forward call).

    weight : (n_out, n_in)  -- PyTorch nn.Linear layout
    bias   : (n_out,)
    Returns a dict with a K-major, 128-padded weight (k_pad, n_pad), a
    (1, n_pad) f32 bias, and the logical dims.
    """
    n_out, n_in = weight.shape
    k_pad = _round_up(n_in, _LANE)
    n_pad = _round_up(n_out, _LANE)

    # K-major RHS => canonical last-dim x first-dim contraction on the MXU,
    # no per-K-step transpose through the XLU inside the kernel.
    w_kn = weight.T
    if (k_pad, n_pad) != (n_in, n_out):
        w_kn = jnp.pad(w_kn, ((0, k_pad - n_in), (0, n_pad - n_out)))
    if param_dtype is not None:
        # TODO(synk): a v7x fp8 weight path needs per-channel scaling before the
        # cast; plain .astype(float8_*) is only safe for well-ranged weights.
        w_kn = w_kn.astype(param_dtype)

    b2d = bias.reshape(1, n_out).astype(jnp.float32)
    if n_pad != n_out:
        b2d = jnp.pad(b2d, ((0, 0), (0, n_pad - n_out)))

    return {"w_kn": w_kn, "b": b2d, "n_in": n_in, "n_out": n_out}


def linear_projection_prepared(x, params, *, compute_dtype=None,
                               tm=512, tn=512, tk=1024):
    """y = x @ W.T + b using pre-prepared parameters (prepare_linear_params)."""
    w_kn, b2d = params["w_kn"], params["b"]
    n_in, n_out = params["n_in"], params["n_out"]
    k_pad, n_pad = w_kn.shape

    lead_shape = x.shape[:-1]
    m = 1
    for d in lead_shape:
        m *= d
    out_dtype = x.dtype

    x2d = x.reshape(m, n_in)
    if compute_dtype is not None and x2d.dtype != compute_dtype:
        # One wrapper-side cast instead of per-tile in-kernel casts: halves the
        # x HBM->VMEM bytes for every (j, k) re-read of x inside the grid.
        x2d = x2d.astype(compute_dtype)
    if k_pad != n_in:
        # K must be zero-padded so the padded tail contributes exactly 0.
        x2d = jnp.pad(x2d, ((0, 0), (0, k_pad - n_in)))

    # --- tile selection ------------------------------------------------------
    if m < _SUBLANE:
        tm = m                                    # block == full dim (allowed)
    else:
        tm = min(tm, (m // _SUBLANE) * _SUBLANE)  # multiple of 8; M tail = edge block
    tn = _lane_tile(n_pad, tn)
    tk = _lane_tile(k_pad, tk)

    x_bytes = x2d.dtype.itemsize
    w_bytes = w_kn.dtype.itemsize
    o_bytes = jnp.dtype(out_dtype).itemsize

    def _footprint(tm_, tn_, tk_):
        # double-buffered in/out tiles + f32 accumulator scratch
        return (2 * (tm_ * tk_ * x_bytes + tk_ * tn_ * w_bytes
                     + tm_ * tn_ * o_bytes + tn_ * 4)
                + tm_ * tn_ * 4)

    while _footprint(tm, tn, tk) > _VMEM_TILE_BUDGET:
        if tk > _LANE:
            tk = _lane_tile(k_pad, max(_LANE, tk // 2))
        elif tn > _LANE:
            tn = _lane_tile(n_pad, max(_LANE, tn // 2))
        elif tm > _SUBLANE:
            tm = max(_SUBLANE, ((tm // 2) // _SUBLANE) * _SUBLANE)
        else:
            break

    grid_m = pl.cdiv(m, tm)
    grid_n = n_pad // tn
    # Keep >=2 blocks along a parallel axis when possible so both v7x
    # TensorCores get work (harmless on 1-TC v5e/v6e, no-op for small N).
    if grid_m * grid_n == 1 and n_pad >= 2 * _LANE and (n_pad // 2) % _LANE == 0:
        tn = n_pad // 2
        grid_n = 2
    grid = (grid_m, grid_n, k_pad // tk)

    # Explicit scoped-VMEM limit with headroom (lifts v5e's 16 MiB default),
    # capped below v7x's 64 MiB physical VMEM per TensorCore.
    vmem_limit = int(max(32 << 20,
                         min(2 * _footprint(tm, tn, tk) + (4 << 20), 64 << 20)))

    # Write directly to (m, n_out) when lane-aligned (no wrapper slice);
    # otherwise emit n_pad columns and slice once.
    out_cols = n_out if n_pad == n_out else n_pad

    out2d = pl.pallas_call(
        _linear_kernel,
        out_shape=jax.ShapeDtypeStruct((m, out_cols), out_dtype),
        grid_spec=pltpu.PrefetchScalarGridSpec(
            num_scalar_prefetch=0,
            grid=grid,
            in_specs=[
                pl.BlockSpec((tm, tk), lambda i, j, k: (i, k)),   # x tile (M, K)
                pl.BlockSpec((tk, tn), lambda i, j, k: (k, j)),   # W tile (K, N)
                pl.BlockSpec((1, tn), lambda i, j, k: (0, j)),    # bias tile
            ],
            out_specs=pl.BlockSpec((tm, tn), lambda i, j, k: (i, j)),
            scratch_shapes=[pltpu.VMEM((tm, tn), jnp.float32)],
        ),
        compiler_params=pltpu.CompilerParams(
            dimension_semantics=("parallel", "parallel", "arbitrary"),
            vmem_limit_bytes=vmem_limit,
        ),
    )(x2d, w_kn, b2d)

    if out_cols != n_out:
        out2d = out2d[:, :n_out]
    return out2d.reshape(*lead_shape, n_out)


def linear_projection(x, weight, bias, *, compute_dtype=None,
                      tm=512, tn=512, tk=1024):
    """Convenience one-shot API: torch.nn.Linear(n_in, n_out)(x).

    For repeated calls, run prepare_linear_params once and call
    linear_projection_prepared so the weight transpose/pad/cast stays off the
    per-call hot path.
    """
    params = prepare_linear_params(weight, bias, param_dtype=compute_dtype)
    return linear_projection_prepared(x, params, compute_dtype=compute_dtype,
                                      tm=tm, tn=tn, tk=tk)


if __name__ == "__main__":
    # Small shapes consistent with a linear projection over the last axis.
    batch, seq, n_in, n_out = 2, 8, 32, 64

    key = jax.random.PRNGKey(0)
    kx, kw, kb = jax.random.split(key, 3)

    x = jax.random.normal(kx, (batch, seq, n_in), dtype=jnp.float32)
    # Deterministic param init (matching nn.Linear's uniform(-1/sqrt(n_in), ...)).
    bound = 1.0 / (n_in ** 0.5)
    weight = jax.random.uniform(kw, (n_out, n_in), dtype=jnp.float32,
                                minval=-bound, maxval=bound)
    bias = jax.random.uniform(kb, (n_out,), dtype=jnp.float32,
                              minval=-bound, maxval=bound)

    # Parameter prep happens once, off the per-call hot path.
    params = prepare_linear_params(weight, bias, param_dtype=None)

    fwd = jax.jit(lambda xx: linear_projection_prepared(xx, params,
                                                        compute_dtype=None))
    out = jax.block_until_ready(fwd(x))

    # Sanity check against plain JAX reference (f32 path -> tight tolerance).
    ref = x @ weight.T + bias
    assert out.shape == (batch, seq, n_out)
    assert jnp.allclose(out, ref, atol=1e-5, rtol=1e-5)

    print("KERNEL_OK")
</pallas_src>

<mosaic_0001>
module attributes {stable_mosaic.version = 11 : i64} {
  func.func @_linear_kernel(%arg0: i32, %arg1: i32, %arg2: i32, %arg3: memref<16x128xf32, #tpu.memory_space<vmem>>, %arg4: memref<128x128xf32, #tpu.memory_space<vmem>>, %arg5: memref<1x128xf32, #tpu.memory_space<vmem>>, %arg6: memref<16x128xf32, #tpu.memory_space<vmem>>, %arg7: memref<16x128xf32, #tpu.memory_space<vmem>>) attributes {dimension_semantics = [#tpu.dimension_semantics<parallel>, #tpu.dimension_semantics<parallel>, #tpu.dimension_semantics<arbitrary>], iteration_bounds = array<i64: 1, 1, 1>, scalar_prefetch = 0 : i64, scratch_operands = 1 : i64, tpu.core_type = #tpu.core_type<tc>, window_params = [{transform_indices = @transform_0, window_bounds = array<i64: 16, 128>}, {transform_indices = @transform_1, window_bounds = array<i64: 128, 128>}, {transform_indices = @transform_2, window_bounds = array<i64: 1, 128>}, {transform_indices = @transform_3, window_bounds = array<i64: 16, 128>}]} {
    %c0_i32 = arith.constant 0 : i32
    %0 = arith.cmpi eq, %arg2, %c0_i32 : i32
    %1 = arith.extui %0 : i1 to i32
    %c0_i32_0 = arith.constant 0 : i32
    %2 = arith.cmpi ne, %1, %c0_i32_0 : i32
    scf.if %2 {
      %cst_10 = arith.constant 0.000000e+00 : f32
      %12 = vector.broadcast %cst_10 : f32 to vector<16x128xf32>
      %c0_11 = arith.constant 0 : index
      %c0_12 = arith.constant 0 : index
      %13 = vector.load %arg7[%c0_11, %c0_12] : memref<16x128xf32, #tpu.memory_space<vmem>>, vector<16x128xf32>
      tpu.vector_store %arg7[%c0_11, %c0_12], %12 {strides = array<i32>} : memref<16x128xf32, #tpu.memory_space<vmem>>, vector<16x128xf32>,
    } else {
    }
    %c0 = arith.constant 0 : index
    %c0_1 = arith.constant 0 : index
    %3 = vector.load %arg7[%c0, %c0_1] : memref<16x128xf32, #tpu.memory_space<vmem>>, vector<16x128xf32>
    %c0_2 = arith.constant 0 : index
    %c0_3 = arith.constant 0 : index
    %4 = vector.load %arg3[%c0_2, %c0_3] : memref<16x128xf32, #tpu.memory_space<vmem>>, vector<16x128xf32>
    %c0_4 = arith.constant 0 : index
    %c0_5 = arith.constant 0 : index
    %5 = vector.load %arg4[%c0_4, %c0_5] : memref<128x128xf32, #tpu.memory_space<vmem>>, vector<128x128xf32>
    %cst = arith.constant dense<0.000000e+00> : vector<16x128xf32>
    %6 = tpu.matmul %4, %5, %cst {dimension_numbers = #tpu.dot_dimension_numbers<[1], [0], [0], [1], [0, 0, 1, 1], [], []>} : vector<16x128xf32>, vector<128x128xf32>, vector<16x128xf32> -> vector<16x128xf32>
    %7 = arith.addf %3, %6 : vector<16x128xf32>
    %c0_6 = arith.constant 0 : index
    %c0_7 = arith.constant 0 : index
    %8 = vector.load %arg7[%c0_6, %c0_7] : memref<16x128xf32, #tpu.memory_space<vmem>>, vector<16x128xf32>
    tpu.vector_store %arg7[%c0_6, %c0_7], %7 {strides = array<i32>} : memref<16x128xf32, #tpu.memory_space<vmem>>, vector<16x128xf32>,
    %c0_i32_8 = arith.constant 0 : i32
    %9 = arith.cmpi eq, %arg2, %c0_i32_8 : i32
    %10 = arith.extui %9 : i1 to i32
    %c0_i32_9 = arith.constant 0 : i32
    %11 = arith.cmpi ne, %10, %c0_i32_9 : i32
    scf.if %11 {
      %c0_10 = arith.constant 0 : index
      %c0_11 = arith.constant 0 : index
      %12 = vector.load %arg7[%c0_10, %c0_11] : memref<16x128xf32, #tpu.memory_space<vmem>>, vector<16x128xf32>
      %c0_12 = arith.constant 0 : index
      %c0_13 = arith.constant 0 : index
      %13 = vector.load %arg5[%c0_12, %c0_13] : memref<1x128xf32, #tpu.memory_space<vmem>>, vector<1x128xf32>
      %14 = vector.broadcast %13 : vector<1x128xf32> to vector<16x128xf32>
      %15 = arith.addf %12, %14 : vector<16x128xf32>
      %c0_14 = arith.constant 0 : index
      %c0_15 = arith.constant 0 : index
      %16 = vector.load %arg6[%c0_14, %c0_15] : memref<16x128xf32, #tpu.memory_space<vmem>>, vector<16x128xf32>
      tpu.vector_store %arg6[%c0_14, %c0_15], %15 {strides = array<i32>} : memref<16x128xf32, #tpu.memory_space<vmem>>, vector<16x128xf32>,
    } else {
    }
    return
  }
  func.func @transform_0(%arg0: i32, %arg1: i32, %arg2: i32) -> (i32, i32) {
    %c0_i32 = arith.constant 0 : i32
    return %arg0, %arg2 : i32, i32
  }
  func.func @transform_1(%arg0: i32, %arg1: i32, %arg2: i32) -> (i32, i32) {
    %c0_i32 = arith.constant 0 : i32
    return %arg2, %arg1 : i32, i32
  }
  func.func @transform_2(%arg0: i32, %arg1: i32, %arg2: i32) -> (i32, i32) {
    %c0_i32 = arith.constant 0 : i32
    %c0_i32_0 = arith.constant 0 : i32
    return %c0_i32, %arg1 : i32, i32
  }
  func.func @transform_3(%arg0: i32, %arg1: i32, %arg2: i32) -> (i32, i32) {
    %c0_i32 = arith.constant 0 : i32
    return %arg0, %arg1 : i32, i32
  }
}

</mosaic_0001>

<llo_original>
// kernel: _lambda_.1
$region0: #{_lambda_.1}
  #allocation0 [shape = 'u32[]', space=smem, size = 0x4, offset = 0x4, fixed_abs, tag = 'smem constant byte address 0x4 - core index']
  #allocation1 [shape = 'u32[144,128]{1,0:T(1,128)}', space=vmem, size = 0x12000, scoped, tag = 'internal scratch']
  #allocation2 [shape = 'f32[16,128]{1,0:T(8,128)}', space=vmem, size = 0x2000, scoped, tag = 'scratch operand']
  %s0 = inlined_call_operand.vmem [shape: f32[16,128], index: 0, kind: input, shape index: {}]
  %s1 = inlined_call_operand.hbm [shape: f32[128,128], index: 1, kind: input, shape index: {}]
  %s2 = inlined_call_operand.vmem [shape: f32[1,128], index: 2, kind: input, shape index: {}]
  %s3 = inlined_call_operand.vmem [shape: f32[16,128], index: 3, kind: output, shape index: {}]
  %s4 = sld [smem:[#allocation0]]
  $region34: #{_lambda_.1} parent=0
    _
  %s6 = ssub.s32 1, %s4
  %s7 = scalar_select 0, %s6, %s4
  $region1: #{_lambda_.1} parent=0
    #allocation3 [shape = 'u8[65536]{0}', space=vmem, size = 0x10000, scoped, tag = 'input window, operand 1, single buffered']
    #allocation4 [shape = 's32[1]{0}', space=sflag, size = 0x4, scoped, tag = 'scoped memory for _lambda_.1']
    %8 = vsyncpa [#allocation4], 0
    // Predicated region
    $region2: #{_lambda_.1} parent=1 // pred_check
      _
    $region3: #{_lambda_.1} parent=1 // pred_check_branch
      %10 = sbr.rel (0) target = $region5
    $region4: #{_lambda_.1} parent=1 // pred_region
      _
    $region5: #{_lambda_.1} parent=1 // pred_fallthru
      _
    // Predicated region
    $region6: #{_lambda_.1} parent=1 // pred_check
      _
    $region7: #{_lambda_.1} parent=1 // pred_check_branch
      %12 = sbr.rel (0) target = $region9
    $region8: #{_lambda_.1} parent=1 // pred_region
      %s14 = ssub.s32 2048, 2048
      %15 = vsyncadd [#allocation4], %s14
      %s16 = sshll.u32 [#allocation3], 4
      %s17 = int_to_ptr.vmem [resolvable:$true] %s16
      %22 = dma.hbm_to_vmem [thread:$0]  %s1, 2048, %s17, [#allocation4], 128, 128, 8
    $region9: #{_lambda_.1} parent=1 // pred_fallthru
      _
    // Predicated region
    $region10: #{_lambda_.1} parent=1 // pred_check
      _
    $region11: #{_lambda_.1} parent=1 // pred_check_branch
      %24 = sbr.rel (0) target = $region13
    $region12: #{_lambda_.1} parent=1 // pred_region
      _
    $region13: #{_lambda_.1} parent=1 // pred_fallthru
      _
    // Predicated region
    $region14: #{_lambda_.1} parent=1 // pred_check
      _
    $region15: #{_lambda_.1} parent=1 // pred_check_branch
      %26 = sbr.rel (0) target = $region17
    $region16: #{_lambda_.1} parent=1 // pred_region
      %27 = dma.done [#allocation4], 2048
    $region17: #{_lambda_.1} parent=1 // pred_fallthru
      _
    %p28 = scmp.eq.s32.totalorder 0, 0
    // Predicated region
    $region18: #{_lambda_.1} parent=1 // pred_check
      %p29 = pneg %p28
    $region19: #{_lambda_.1} parent=1 // pred_check_branch
      %31 = sbr.rel (%p29) target = $region21
    $region20: #{_lambda_.1} parent=1 // pred_region
      %32 = vst [vmem:[#allocation2] sm:$0xff] 0.0
      %33 = vst [vmem:[#allocation2 + $0x8] sm:$0xff] 0.0
    $region21: #{_lambda_.1} parent=1 // pred_fallthru
      _
    %v34 = vld [vmem:[#allocation2] sm:$0xff]
    %v35 = vld [vmem:[#allocation2 + $0x8] sm:$0xff]
    %v36 = vld [vmem:[%s0] sm:$0xff]
    %v37 = vld [vmem:[%s0 + $0x8] sm:$0xff]
    %v38 = vld [vmem:[#allocation3] sm:$0xff]
    %v39 = vld [vmem:[#allocation3 + $0x8] sm:$0xff]
    %v40 = vld [vmem:[#allocation3 + $0x10] sm:$0xff]
    %v41 = vld [vmem:[#allocation3 + $0x18] sm:$0xff]
    %v42 = vld [vmem:[#allocation3 + $0x20] sm:$0xff]
    %v43 = vld [vmem:[#allocation3 + $0x28] sm:$0xff]
    %v44 = vld [vmem:[#allocation3 + $0x30] sm:$0xff]
    %v45 = vld [vmem:[#allocation3 + $0x38] sm:$0xff]
    %v46 = vld [vmem:[#allocation3 + $0x40] sm:$0xff]
    %v47 = vld [vmem:[#allocation3 + $0x48] sm:$0xff]
    %v48 = vld [vmem:[#allocation3 + $0x50] sm:$0xff]
    %v49 = vld [vmem:[#allocation3 + $0x58] sm:$0xff]
    %v50 = vld [vmem:[#allocation3 + $0x60] sm:$0xff]
    %v51 = vld [vmem:[#allocation3 + $0x68] sm:$0xff]
    %v52 = vld [vmem:[#allocation3 + $0x70] sm:$0xff]
    %v53 = vld [vmem:[#allocation3 + $0x78] sm:$0xff]
    %54 = vmatprep.subr.mxu0 0.0
    %55 = vmatpush1.msra.mxu0 %v38
    %56 = vmatprep.subr.mxu0 0.0
    %57 = vmatpush1.msra.mxu0 %v39
    %58 = vmatprep.subr.mxu0 0.0
    %59 = vmatpush1.msra.mxu0 %v40
    %60 = vmatprep.subr.mxu0 0.0
    %61 = vmatpush1.msra.mxu0 %v41
    %62 = vmatprep.subr.mxu0 0.0
    %63 = vmatpush1.msra.mxu0 %v42
    %64 = vmatprep.subr.mxu0 0.0
    %65 = vmatpush1.msra.mxu0 %v43
    %66 = vmatprep.subr.mxu0 0.0
    %67 = vmatpush1.msra.mxu0 %v44
    %68 = vmatprep.subr.mxu0 0.0
    %69 = vmatpush1.msra.mxu0 %v45
    %70 = vmatprep.subr.mxu0 0.0
    %71 = vmatpush1.msra.mxu0 %v46
    %72 = vmatprep.subr.mxu0 0.0
    %73 = vmatpush1.msra.mxu0 %v47
    %74 = vmatprep.subr.mxu0 0.0
    %75 = vmatpush1.msra.mxu0 %v48
    %76 = vmatprep.subr.mxu0 0.0
    %77 = vmatpush1.msra.mxu0 %v49
    %78 = vmatprep.subr.mxu0 0.0
    %79 = vmatpush1.msra.mxu0 %v50
    %80 = vmatprep.subr.mxu0 0.0
    %81 = vmatpush1.msra.mxu0 %v51
    %82 = vmatprep.subr.mxu0 0.0
    %83 = vmatpush1.msra.mxu0 %v52
    %84 = vmatprep.subr.mxu0 0.0
    %85 = vmatpush1.msra.mxu0 %v53
    %86 = vmatprep.subr.mxu0 0.0
    %87 = vmatpush1.msra.mxu0 0.0
    %88 = vmatprep.subr.mxu0 0.0
    %89 = vmatpush1.msra.mxu0 0.0
    %90 = vmatprep.subr.mxu0 0.0
    %91 = vmatpush1.msra.mxu0 0.0
    %92 = vmatprep.subr.mxu0 0.0
    %93 = vmatpush1.msra.mxu0 0.0
    %94 = vmatprep.subr.mxu0 0.0
    %95 = vmatpush1.msra.mxu0 0.0
    %96 = vmatprep.subr.mxu0 0.0
    %97 = vmatpush1.msra.mxu0 0.0
    %98 = vmatprep.subr.mxu0 0.0
    %99 = vmatpush1.msra.mxu0 0.0
    %100 = vmatprep.subr.mxu0 0.0
    %101 = vmatpush1.msra.mxu0 0.0
    %102 = vmatprep.subr.mxu0 0.0
    %103 = vmatpush1.msra.mxu0 0.0
    %104 = vmatprep.subr.mxu0 0.0
    %105 = vmatpush1.msra.mxu0 0.0
    %106 = vmatprep.subr.mxu0 0.0
    %107 = vmatpush1.msra.mxu0 0.0
    %108 = vmatprep.subr.mxu0 0.0
    %109 = vmatpush1.msra.mxu0 0.0
    %110 = vmatprep.subr.mxu0 0.0
    %111 = vmatpush1.msra.mxu0 0.0
    %112 = vmatprep.subr.mxu0 0.0
    %113 = vmatpush1.msra.mxu0 0.0
    %114 = vmatprep.subr.mxu0 0.0
    %115 = vmatpush1.msra.mxu0 0.0
    %116 = vmatprep.subr.mxu0 0.0
    %117 = vmatpush1.msra.mxu0 0.0
    %118 = vmatprep.mubr.f32.mxu0 0.0
    %119 = vmatmul.mubr.f32.gmra.mrb[0].mxu0 %v36
    %v120 = vpop.f32.mrb[0].mxu0
    %v121 = vadd.f32 0.0, %v120
    %v122 = vpop.f32.mrb[0].mxu0
    %123 = vmatprep.mubr.f32.mxu0 0.0
    %124 = vmatmul.mubr.f32.gmra.mrb[0].mxu0 %v37
    %v125 = vpop.f32.mrb[0].mxu0
    %v126 = vadd.f32 0.0, %v125
    %v127 = vpop.f32.mrb[0].mxu0
    %128 = vdwg.mxu0
    %v129 = vadd.f32 %v34, %v121
    %v130 = vadd.f32 %v35, %v126
    %131 = vst [vmem:[#allocation2] sm:$0xff] %v129
    %132 = vst [vmem:[#allocation2 + $0x8] sm:$0xff] %v130
    // Predicated region
    $region22: #{_lambda_.1} parent=1 // pred_check
      %p133 = pneg %p28
    $region23: #{_lambda_.1} parent=1 // pred_check_branch
      %135 = sbr.rel (%p133) target = $region25
    $region24: #{_lambda_.1} parent=1 // pred_region
      %v136 = vld [vmem:[#allocation2] sm:$0xff]
      %v137 = vld [vmem:[#allocation2 + $0x8] sm:$0xff]
      %v138 = vld [vmem:[%s2] sm:$0x1]
      %v140 = vlaneseq
      %v141 = vshrl.u32 %v140, 7
      %v142 = vsub.s32 0, %v141
      %v143 = vrot.slane %v138, %v142
      %v145 = vadd.f32 %v136, %v143
      %v146 = vadd.f32 %v137, %v143
      %147 = vst [vmem:[%s3] sm:$0xff] %v145
      %148 = vst [vmem:[%s3 + $0x8] sm:$0xff] %v146
    $region25: #{_lambda_.1} parent=1 // pred_fallthru
      _
    // Predicated region
    $region26: #{_lambda_.1} parent=1 // pred_check
      _
    $region27: #{_lambda_.1} parent=1 // pred_check_branch
      %150 = sbr.rel (0) target = $region29
    $region28: #{_lambda_.1} parent=1 // pred_region
      _
    $region29: #{_lambda_.1} parent=1 // pred_fallthru
      _
    // Predicated region
    $region30: #{_lambda_.1} parent=1 // pred_check
      _
    $region31: #{_lambda_.1} parent=1 // pred_check_branch
      %152 = sbr.rel (0) target = $region33
    $region32: #{_lambda_.1} parent=1 // pred_region
      _
    $region33: #{_lambda_.1} parent=1 // pred_fallthru
      _
    %153 = vsyncpa [#allocation4], 1

</llo_original>
